<compile_context>
chip_gen: v7x
topology: tpu7x:2x2x1
jax: 0.10.0
libtpu: 0.0.40
codegen_flags: <defaults>
</compile_context>

<pallas_src>
import functools

import jax
import jax.numpy as jnp
from jax import lax
from jax.experimental import pallas as pl
from jax.experimental.pallas import tpu as pltpu


def _round_up(x, m):
    return (x + m - 1) // m * m


# ------------------------------ Pallas kernel ------------------------------ #
def _fused_subsample_kernel(x_ref, u_ref, g_ref, o_ref):
    """One (TM x Np) output tile per grid step; M = flattened B*H2.

    x_ref : (TM, 20*D)   bf16  window slab (x rows 10*h2 .. 10*h2+19)
    u_ref : (20*D, KWp)  bf16  conv1 taps in window layout, cols zero-padded
    g_ref : (2*KWp, Np)  bf16  stacked [Gp; Gm] conv2 (dw+pw) weights
    o_ref : (TM, Np)     f32   final (b*H2+h2, c*W2+w2) layout, lane-padded
    """
    # conv1 (k=3, s=2) at exactly the rows conv2 needs, window layout:
    #   zw[m, kh*W1 + w1] = z1[b, 5*h2 + kh, w1]
    zw = jnp.dot(x_ref[...], u_ref[...], preferred_element_type=jnp.float32)

    # relu(pw1*z) split -> conv2 is linear in (relu(zw), relu(-zw)); both
    # halves go through ONE stacked MXU dot (lane-aligned concat, KWp%128==0).
    zp = jnp.maximum(zw, 0.0).astype(jnp.bfloat16)
    zm = jnp.maximum(-zw, 0.0).astype(jnp.bfloat16)
    zcat = jnp.concatenate([zp, zm], axis=-1)            # (TM, 2*KWp)

    acc = jnp.dot(zcat, g_ref[...], preferred_element_type=jnp.float32)
    o_ref[...] = jnp.maximum(acc, 0.0)


# ----------------------- wrapper-side weight folding ----------------------- #
def _conv1_mat(dw1, *, D, W1, KWp, dtype):
    """U[j*D+d, kh*W1+w1] = dw1[j-2*kh, d-2*w1] when both taps are in [0,3),
    else 0.  Then ZW = X20 @ U reproduces conv1 at the rows conv2 needs."""
    k3 = dw1.reshape(3, 3)
    j = jnp.arange(20)[:, None, None, None]     # row within the 20-row window
    d = jnp.arange(D)[None, :, None, None]      # input feature column
    kh = jnp.arange(7)[None, None, :, None]     # conv2 kernel row (window row)
    w1 = jnp.arange(W1)[None, None, None, :]    # conv1 output column
    ih = j - 2 * kh
    iw = d - 2 * w1
    ok = (ih >= 0) & (ih <= 2) & (iw >= 0) & (iw <= 2)
    val = k3[jnp.clip(ih, 0, 2), jnp.clip(iw, 0, 2)]
    u = jnp.where(ok, val, 0.0).reshape(20 * D, 7 * W1)
    u = jnp.pad(u, ((0, 0), (0, KWp - 7 * W1)))          # lane-pad columns
    return u.astype(dtype)


def _conv2_mat(dw2, pw2, pw1, *, W1, W2, KWp, Np, dtype):
    """Stacked [Gp; Gm] of shape (2*KWp, Np): conv2 depthwise(7x7,s=5) +
    pointwise collapsed over the relu-split of conv1's pointwise, columns in
    the final (c_out*W2 + w2) order, rows/cols zero-padded for lane density."""
    C = dw2.shape[0]
    dw2_ = dw2[:, 0, :, :]                      # (C, 7, 7)
    pw2_ = pw2[:, :, 0, 0]                      # (C_out, C_in)
    p1 = pw1[:, 0, 0, 0]                        # (C,)
    wp = jnp.einsum('oc,c,cij->oij', pw2_, jnp.maximum(p1, 0.0), dw2_)
    wm = jnp.einsum('oc,c,cij->oij', pw2_, jnp.maximum(-p1, 0.0), dw2_)

    kh = jnp.arange(7)[:, None, None, None]
    w1 = jnp.arange(W1)[None, :, None, None]
    co = jnp.arange(C)[None, None, :, None]
    w2 = jnp.arange(W2)[None, None, None, :]
    kw = w1 - 5 * w2
    ok = (kw >= 0) & (kw <= 6)

    def build(wmat):
        val = wmat[co, kh, jnp.clip(kw, 0, 6)]            # (7, W1, C, W2)
        g = jnp.where(ok, val, 0.0).reshape(7 * W1, C * W2)
        return jnp.pad(g, ((0, KWp - 7 * W1), (0, Np - C * W2)))

    return jnp.concatenate([build(wp), build(wm)], axis=0).astype(dtype)


# --------------------------------- forward --------------------------------- #
def _row_tile_for_device():
    """MXU-height row tile per generation: 128 on v5e, 256 on v6e/v7x."""
    try:
        kind = jax.devices()[0].device_kind.lower()
    except Exception:  # pragma: no cover - defensive; default is fine
        kind = ""
    if ("v5 lite" in kind) or ("v5e" in kind) or ("v5lite" in kind):
        return 128
    return 256


@functools.partial(jax.jit, static_argnames=("row_tile",))
def conv2d_subsampling_forward(x, dw1, pw1, dw2, pw2, *, row_tile=256):
    """x: (B, T, D) f32 -> (B, H2, C*W2) f32 (matches the PyTorch module)."""
    B, T, D = x.shape
    C = pw1.shape[0]
    H1 = (T - 3) // 2 + 1
    W1 = (D - 3) // 2 + 1
    H2 = (H1 - 7) // 5 + 1
    W2 = (W1 - 7) // 5 + 1
    assert H2 >= 1 and W2 >= 1, "input too small for k=3,s=2 then k=7,s=5"

    KW = 7 * W1
    KWp = _round_up(KW, 128)            # lane-dense intermediate width
    N = C * W2
    Np = _round_up(N, 128)              # lane-dense output width
    M = B * H2                          # batch*time flattened into MXU M
    TM = min(row_tile, _round_up(M, 8))
    Mp = _round_up(M, TM)

    # bf16 window slab: x20[b*H2+h2, j*D+d] = x[b, 10*h2 + j, d], j in [0,20).
    # (10 = product of the two strides; rows >= 15 within a window and all
    # padded rows carry zero weight in U, so padding is exact.)
    T10 = max(-(-T // 10), H2 + 1)
    xpad = jnp.pad(x, ((0, 0), (0, T10 * 10 - T), (0, 0)))
    xg = xpad.reshape(B, T10, 10 * D)
    x20 = jnp.concatenate([xg[:, :H2], xg[:, 1:H2 + 1]], axis=-1)  # (B,H2,20D)
    x20 = x20.reshape(M, 20 * D).astype(jnp.bfloat16)              # single cast
    x20 = jnp.pad(x20, ((0, Mp - M), (0, 0)))

    wdt = jnp.bfloat16
    u = _conv1_mat(dw1, D=D, W1=W1, KWp=KWp, dtype=wdt)            # (20D, KWp)
    g = _conv2_mat(dw2, pw2, pw1, W1=W1, W2=W2, KWp=KWp, Np=Np, dtype=wdt)

    flops = 2 * Mp * ((20 * D) * KWp + (2 * KWp) * Np)
    bytes_accessed = x20.size * 2 + (u.size + g.size) * 2 + Mp * Np * 4

    # Per-step VMEM footprint (input/output double-buffered, weights single-
    # buffered, plus intermediates); keep a healthy limit for v5e's 16 MiB
    # default scoped VMEM while staying well under v7x's 64 MiB physical.
    step_bytes = (2 * TM * (20 * D) * 2 + 2 * TM * Np * 4
                  + u.size * 2 + g.size * 2
                  + TM * KWp * 4 + TM * 2 * KWp * 2)
    vmem_limit = min(max(32 * 1024 * 1024, 2 * step_bytes), 64 * 1024 * 1024)

    out_flat = pl.pallas_call(
        _fused_subsample_kernel,
        out_shape=jax.ShapeDtypeStruct((Mp, Np), jnp.float32),
        grid=(Mp // TM,),
        in_specs=[
            pl.BlockSpec((TM, 20 * D), lambda m: (m, 0)),
            # Constant weights: block index never changes -> single buffer.
            pl.BlockSpec((20 * D, KWp), lambda m: (0, 0),
                         pipeline_mode=pl.Buffered(buffer_count=1)),
            pl.BlockSpec((2 * KWp, Np), lambda m: (0, 0),
                         pipeline_mode=pl.Buffered(buffer_count=1)),
        ],
        out_specs=pl.BlockSpec((TM, Np), lambda m: (m, 0)),
        compiler_params=pltpu.CompilerParams(
            dimension_semantics=("parallel",),      # v7x: shards M across 2 TCs
            vmem_limit_bytes=vmem_limit),
        cost_estimate=pl.CostEstimate(
            flops=flops, transcendentals=0, bytes_accessed=bytes_accessed),
    )(x20, u, g)

    # Cheap lane/row de-padding + final reshape outside the kernel.
    return out_flat[:M, :N].reshape(B, H2, N)


# --------------------------- pure-JAX reference ----------------------------- #
def _reference(x, dw1, pw1, dw2, pw2):
    h = x[:, None, :, :]
    dn = ("NCHW", "OIHW", "NCHW")

    def dsconv(h, dw, pw, stride):
        groups = dw.shape[0]
        d = lax.conv_general_dilated(h, dw, (stride, stride), "VALID",
                                     dimension_numbers=dn,
                                     feature_group_count=groups)
        p = lax.conv_general_dilated(d, pw, (1, 1), "VALID",
                                     dimension_numbers=dn)
        return jax.nn.relu(p)

    h = dsconv(h, dw1, pw1, 2)
    h = dsconv(h, dw2, pw2, 5)
    B, C, H2, W2 = h.shape
    return h.transpose(0, 2, 1, 3).reshape(B, H2, C * W2)


# ----------------------------------- main ----------------------------------- #
if __name__ == "__main__":
    B, T, D = 2, 32, 32            # in_channels is 1 after unsqueeze(1)
    C = 8                          # out_channels

    key = jax.random.PRNGKey(0)
    kx, k1, k2, k3, k4 = jax.random.split(key, 5)
    x = jax.random.normal(kx, (B, T, D), jnp.float32)

    # Parameter shapes mirror the PyTorch module (bias=False everywhere):
    dw1 = jax.random.normal(k1, (1, 1, 3, 3), jnp.float32) * 0.1   # conv1.depthwise
    pw1 = jax.random.normal(k2, (C, 1, 1, 1), jnp.float32) * 0.1   # conv1.pointwise
    dw2 = jax.random.normal(k3, (C, 1, 7, 7), jnp.float32) * 0.1   # conv2.depthwise
    pw2 = jax.random.normal(k4, (C, C, 1, 1), jnp.float32) * 0.1   # conv2.pointwise

    row_tile = _row_tile_for_device()
    out = jax.block_until_ready(
        conv2d_subsampling_forward(x, dw1, pw1, dw2, pw2, row_tile=row_tile))

    ref = _reference(x, dw1, pw1, dw2, pw2)
    assert out.shape == ref.shape == (B, 2, C * 2), (out.shape, ref.shape)
    scale = max(float(jnp.max(jnp.abs(ref))), 1e-6)
    rel_err = float(jnp.max(jnp.abs(out - ref))) / scale
    # bf16 MXU operands with f32 accumulation -> loosened (relative) tolerance.
    assert rel_err < 5e-2, f"mismatch vs reference: rel max err {rel_err}"

    print("KERNEL_OK")
</pallas_src>

<mosaic_0001>
module attributes {stable_mosaic.version = 11 : i64} {
  func.func @_fused_subsample_kernel(%arg0: i32, %arg1: memref<8x640xbf16, #tpu.memory_space<vmem>>, %arg2: memref<640x128xbf16, #tpu.memory_space<vmem>>, %arg3: memref<256x128xbf16, #tpu.memory_space<vmem>>, %arg4: memref<8x128xf32, #tpu.memory_space<vmem>>) attributes {dimension_semantics = [#tpu.dimension_semantics<parallel>], iteration_bounds = array<i64: 1>, scalar_prefetch = 0 : i64, scratch_operands = 0 : i64, tpu.core_type = #tpu.core_type<tc>, window_params = [{transform_indices = @transform_0, window_bounds = array<i64: 8, 640>}, {pipeline_mode = #tpu.pipeline_mode<synchronous>, transform_indices = @transform_1, window_bounds = array<i64: 640, 128>}, {pipeline_mode = #tpu.pipeline_mode<synchronous>, transform_indices = @transform_2, window_bounds = array<i64: 256, 128>}, {transform_indices = @transform_3, window_bounds = array<i64: 8, 128>}]} {
    %c0 = arith.constant 0 : index
    %c0_0 = arith.constant 0 : index
    %0 = vector.load %arg1[%c0, %c0_0] : memref<8x640xbf16, #tpu.memory_space<vmem>>, vector<8x640xbf16>
    %c0_1 = arith.constant 0 : index
    %c0_2 = arith.constant 0 : index
    %1 = vector.load %arg2[%c0_1, %c0_2] : memref<640x128xbf16, #tpu.memory_space<vmem>>, vector<640x128xbf16>
    %cst = arith.constant dense<0.000000e+00> : vector<8x128xf32>
    %2 = tpu.matmul %0, %1, %cst {dimension_numbers = #tpu.dot_dimension_numbers<[1], [0], [0], [1], [0, 0, 1, 1], [], []>} : vector<8x640xbf16>, vector<640x128xbf16>, vector<8x128xf32> -> vector<8x128xf32>
    %cst_3 = arith.constant 0.000000e+00 : f32
    %3 = vector.broadcast %cst_3 : f32 to vector<8x128xf32>
    %4 = arith.maximumf %2, %3 : vector<8x128xf32>
    %5 = arith.truncf %4 : vector<8x128xf32> to vector<8x128xbf16>
    %cst_4 = arith.constant 0.000000e+00 : f32
    %6 = vector.broadcast %cst_4 : f32 to vector<8x128xf32>
    %7 = arith.subf %6, %2 : vector<8x128xf32>
    %cst_5 = arith.constant 0.000000e+00 : f32
    %8 = vector.broadcast %cst_5 : f32 to vector<8x128xf32>
    %9 = arith.maximumf %7, %8 : vector<8x128xf32>
    %10 = arith.truncf %9 : vector<8x128xf32> to vector<8x128xbf16>
    %11 = tpu.concatenate %5, %10 in 1 : vector<8x128xbf16>, vector<8x128xbf16> -> vector<8x256xbf16>
    %c0_6 = arith.constant 0 : index
    %c0_7 = arith.constant 0 : index
    %12 = vector.load %arg3[%c0_6, %c0_7] : memref<256x128xbf16, #tpu.memory_space<vmem>>, vector<256x128xbf16>
    %cst_8 = arith.constant dense<0.000000e+00> : vector<8x128xf32>
    %13 = tpu.matmul %11, %12, %cst_8 {dimension_numbers = #tpu.dot_dimension_numbers<[1], [0], [0], [1], [0, 0, 1, 1], [], []>} : vector<8x256xbf16>, vector<256x128xbf16>, vector<8x128xf32> -> vector<8x128xf32>
    %cst_9 = arith.constant 0.000000e+00 : f32
    %14 = vector.broadcast %cst_9 : f32 to vector<8x128xf32>
    %15 = arith.maximumf %13, %14 : vector<8x128xf32>
    %c0_10 = arith.constant 0 : index
    %c0_11 = arith.constant 0 : index
    %16 = vector.load %arg4[%c0_10, %c0_11] : memref<8x128xf32, #tpu.memory_space<vmem>>, vector<8x128xf32>
    tpu.vector_store %arg4[%c0_10, %c0_11], %15 {strides = array<i32>} : memref<8x128xf32, #tpu.memory_space<vmem>>, vector<8x128xf32>,
    return
  }
  func.func @transform_0(%arg0: i32) -> (i32, i32) {
    %c0_i32 = arith.constant 0 : i32
    %c0_i32_0 = arith.constant 0 : i32
    return %arg0, %c0_i32 : i32, i32
  }
  func.func @transform_1(%arg0: i32) -> (i32, i32) {
    %c0_i32 = arith.constant 0 : i32
    %c0_i32_0 = arith.constant 0 : i32
    %c0_i32_1 = arith.constant 0 : i32
    return %c0_i32, %c0_i32_0 : i32, i32
  }
  func.func @transform_2(%arg0: i32) -> (i32, i32) {
    %c0_i32 = arith.constant 0 : i32
    %c0_i32_0 = arith.constant 0 : i32
    %c0_i32_1 = arith.constant 0 : i32
    return %c0_i32, %c0_i32_0 : i32, i32
  }
  func.func @transform_3(%arg0: i32) -> (i32, i32) {
    %c0_i32 = arith.constant 0 : i32
    %c0_i32_0 = arith.constant 0 : i32
    return %arg0, %c0_i32 : i32, i32
  }
}

</mosaic_0001>

<llo_original>
// kernel: conv2d_subsampling_forward.1
$region0: #{conv2d_subsampling_forward.1}
  #allocation0 [shape = 'u32[]', space=smem, size = 0x4, offset = 0x4, fixed_abs, tag = 'smem constant byte address 0x4 - core index']
  #allocation1 [shape = 'u32[144,128]{1,0:T(1,128)}', space=vmem, size = 0x12000, scoped, tag = 'internal scratch']
  %s0 = inlined_call_operand.vmem [shape: bf16[8,640], index: 0, kind: input, shape index: {}]
  %s1 = inlined_call_operand.vmem [shape: bf16[640,128], index: 1, kind: input, shape index: {}]
  %s2 = inlined_call_operand.vmem [shape: bf16[256,128], index: 2, kind: input, shape index: {}]
  %s3 = inlined_call_operand.vmem [shape: f32[8,128], index: 3, kind: output, shape index: {}]
  %s4 = sld [smem:[#allocation0]]
  $region22: #{conv2d_subsampling_forward.1} parent=0
    _
  %s6 = ssub.s32 1, %s4
  %s7 = scalar_select 0, %s6, %s4
  // Predicated region
  $region2: #{conv2d_subsampling_forward.1} parent=0 // pred_check
    _
  $region3: #{conv2d_subsampling_forward.1} parent=0 // pred_check_branch
    %9 = sbr.rel (0) target = $region5
  $region4: #{conv2d_subsampling_forward.1} parent=0 // pred_region
    _
  $region5: #{conv2d_subsampling_forward.1} parent=0 // pred_fallthru
    _
  // Predicated region
  $region6: #{conv2d_subsampling_forward.1} parent=0 // pred_check
    _
  $region7: #{conv2d_subsampling_forward.1} parent=0 // pred_check_branch
    %11 = sbr.rel (0) target = $region9
  $region8: #{conv2d_subsampling_forward.1} parent=0 // pred_region
    _
  $region9: #{conv2d_subsampling_forward.1} parent=0 // pred_fallthru
    _
  // Predicated region
  $region10: #{conv2d_subsampling_forward.1} parent=0 // pred_check
    _
  $region11: #{conv2d_subsampling_forward.1} parent=0 // pred_check_branch
    %13 = sbr.rel (0) target = $region13
  $region12: #{conv2d_subsampling_forward.1} parent=0 // pred_region
    _
  $region13: #{conv2d_subsampling_forward.1} parent=0 // pred_fallthru
    _
  %v15 = vld [vmem:[%s0] sm:$0xff]
  %v16 = vld [vmem:[%s0 + $0x8] sm:$0xff]
  %v17 = vld [vmem:[%s0 + $0x10] sm:$0xf]
  %v18 = vld [vmem:[%s1] sm:$0xf]
  %v19 = vld [vmem:[%s1 + $0x4] sm:$0xf]
  %v20 = vld [vmem:[%s1 + $0x8] sm:$0xf]
  %v21 = vld [vmem:[%s1 + $0xc] sm:$0xf]
  %v22 = vld [vmem:[%s1 + $0x10] sm:$0xf]
  %v23 = vld [vmem:[%s1 + $0x14] sm:$0xf]
  %v24 = vld [vmem:[%s1 + $0x18] sm:$0xf]
  %v25 = vld [vmem:[%s1 + $0x1c] sm:$0xf]
  %v26 = vld [vmem:[%s1 + $0x20] sm:$0xf]
  %v27 = vld [vmem:[%s1 + $0x24] sm:$0xf]
  %v28 = vld [vmem:[%s1 + $0x28] sm:$0xf]
  %v29 = vld [vmem:[%s1 + $0x2c] sm:$0xf]
  %v30 = vld [vmem:[%s1 + $0x30] sm:$0xf]
  %v31 = vld [vmem:[%s1 + $0x34] sm:$0xf]
  %v32 = vld [vmem:[%s1 + $0x38] sm:$0xf]
  %v33 = vld [vmem:[%s1 + $0x3c] sm:$0xf]
  %v34 = vld [vmem:[%s1 + $0x40] sm:$0xf]
  %v35 = vld [vmem:[%s1 + $0x44] sm:$0xf]
  %v36 = vld [vmem:[%s1 + $0x48] sm:$0xf]
  %v37 = vld [vmem:[%s1 + $0x4c] sm:$0xf]
  %v38 = vld [vmem:[%s1 + $0x50] sm:$0xf]
  %v39 = vld [vmem:[%s1 + $0x54] sm:$0xf]
  %v40 = vld [vmem:[%s1 + $0x58] sm:$0xf]
  %v41 = vld [vmem:[%s1 + $0x5c] sm:$0xf]
  %v42 = vld [vmem:[%s1 + $0x60] sm:$0xf]
  %v43 = vld [vmem:[%s1 + $0x64] sm:$0xf]
  %v44 = vld [vmem:[%s1 + $0x68] sm:$0xf]
  %v45 = vld [vmem:[%s1 + $0x6c] sm:$0xf]
  %v46 = vld [vmem:[%s1 + $0x70] sm:$0xf]
  %v47 = vld [vmem:[%s1 + $0x74] sm:$0xf]
  %v48 = vld [vmem:[%s1 + $0x78] sm:$0xf]
  %v49 = vld [vmem:[%s1 + $0x7c] sm:$0xf]
  %v50 = vld [vmem:[%s1 + $0x80] sm:$0xf]
  %v51 = vld [vmem:[%s1 + $0x84] sm:$0xf]
  %v52 = vld [vmem:[%s1 + $0x88] sm:$0xf]
  %v53 = vld [vmem:[%s1 + $0x8c] sm:$0xf]
  %v54 = vld [vmem:[%s1 + $0x90] sm:$0xf]
  %v55 = vld [vmem:[%s1 + $0x94] sm:$0xf]
  %v56 = vld [vmem:[%s1 + $0x98] sm:$0xf]
  %v57 = vld [vmem:[%s1 + $0x9c] sm:$0xf]
  %v58 = vld [vmem:[%s1 + $0xa0] sm:$0xf]
  %v59 = vld [vmem:[%s1 + $0xa4] sm:$0xf]
  %v60 = vld [vmem:[%s1 + $0xa8] sm:$0xf]
  %v61 = vld [vmem:[%s1 + $0xac] sm:$0xf]
  %v62 = vld [vmem:[%s1 + $0xb0] sm:$0xf]
  %v63 = vld [vmem:[%s1 + $0xb4] sm:$0xf]
  %v64 = vld [vmem:[%s1 + $0xb8] sm:$0xf]
  %v65 = vld [vmem:[%s1 + $0xbc] sm:$0xf]
  %v66 = vld [vmem:[%s1 + $0xc0] sm:$0xf]
  %v67 = vld [vmem:[%s1 + $0xc4] sm:$0xf]
  %v68 = vld [vmem:[%s1 + $0xc8] sm:$0xf]
  %v69 = vld [vmem:[%s1 + $0xcc] sm:$0xf]
  %v70 = vld [vmem:[%s1 + $0xd0] sm:$0xf]
  %v71 = vld [vmem:[%s1 + $0xd4] sm:$0xf]
  %v72 = vld [vmem:[%s1 + $0xd8] sm:$0xf]
  %v73 = vld [vmem:[%s1 + $0xdc] sm:$0xf]
  %v74 = vld [vmem:[%s1 + $0xe0] sm:$0xf]
  %v75 = vld [vmem:[%s1 + $0xe4] sm:$0xf]
  %v76 = vld [vmem:[%s1 + $0xe8] sm:$0xf]
  %v77 = vld [vmem:[%s1 + $0xec] sm:$0xf]
  %v78 = vld [vmem:[%s1 + $0xf0] sm:$0xf]
  %v79 = vld [vmem:[%s1 + $0xf4] sm:$0xf]
  %v80 = vld [vmem:[%s1 + $0xf8] sm:$0xf]
  %v81 = vld [vmem:[%s1 + $0xfc] sm:$0xf]
  %v82 = vld [vmem:[%s1 + $0x100] sm:$0xf]
  %v83 = vld [vmem:[%s1 + $0x104] sm:$0xf]
  %v84 = vld [vmem:[%s1 + $0x108] sm:$0xf]
  %v85 = vld [vmem:[%s1 + $0x10c] sm:$0xf]
  %v86 = vld [vmem:[%s1 + $0x110] sm:$0xf]
  %v87 = vld [vmem:[%s1 + $0x114] sm:$0xf]
  %v88 = vld [vmem:[%s1 + $0x118] sm:$0xf]
  %v89 = vld [vmem:[%s1 + $0x11c] sm:$0xf]
  %v90 = vld [vmem:[%s1 + $0x120] sm:$0xf]
  %v91 = vld [vmem:[%s1 + $0x124] sm:$0xf]
  %v92 = vld [vmem:[%s1 + $0x128] sm:$0xf]
  %v93 = vld [vmem:[%s1 + $0x12c] sm:$0xf]
  %v94 = vld [vmem:[%s1 + $0x130] sm:$0xf]
  %v95 = vld [vmem:[%s1 + $0x134] sm:$0xf]
  %v96 = vld [vmem:[%s1 + $0x138] sm:$0xf]
  %v97 = vld [vmem:[%s1 + $0x13c] sm:$0xf]
  %v101 = vunpack.c.l.b16 %v15
  %v102 = vunpack.c.h.b16 %v15
  %v103 = vunpack.c.l.b16 %v16
  %v104 = vunpack.c.h.b16 %v16
  %v105 = vunpack.c.l.b16 %v17
  %v106 = vpack.c.b16 %v101, %v101
  %v107 = vpack.c.b16 %v102, %v102
  %v108 = vpack.c.b16 %v103, %v103
  %v109 = vpack.c.b16 %v104, %v104
  %v110 = vpack.c.b16 %v105, %v105
  %v196 = vunpack.c.l.b16 %v18
  %v197 = vunpack.c.l.b16 %v19
  %v198 = vunpack.c.l.b16 %v20
  %v199 = vunpack.c.l.b16 %v21
  %v200 = vunpack.c.l.b16 %v22
  %v201 = vunpack.c.l.b16 %v23
  %v202 = vunpack.c.l.b16 %v24
  %v203 = vunpack.c.l.b16 %v25
  %v204 = vunpack.c.l.b16 %v26
  %v205 = vunpack.c.l.b16 %v27
  %v206 = vunpack.c.l.b16 %v28
  %v207 = vunpack.c.l.b16 %v29
  %v208 = vunpack.c.l.b16 %v30
  %v209 = vunpack.c.l.b16 %v31
  %v210 = vunpack.c.l.b16 %v32
  %v211 = vunpack.c.l.b16 %v33
  %v212 = vunpack.c.l.b16 %v34
  %v213 = vunpack.c.l.b16 %v35
  %v214 = vunpack.c.l.b16 %v36
  %v215 = vunpack.c.l.b16 %v37
  %v216 = vunpack.c.l.b16 %v38
  %v217 = vunpack.c.l.b16 %v39
  %v218 = vunpack.c.l.b16 %v40
  %v219 = vunpack.c.l.b16 %v41
  %v220 = vunpack.c.l.b16 %v42
  %v221 = vunpack.c.l.b16 %v43
  %v222 = vunpack.c.l.b16 %v44
  %v223 = vunpack.c.l.b16 %v45
  %v224 = vunpack.c.l.b16 %v46
  %v225 = vunpack.c.l.b16 %v47
  %v226 = vunpack.c.l.b16 %v48
  %v227 = vunpack.c.l.b16 %v49
  %v228 = vunpack.c.l.b16 %v50
  %v229 = vunpack.c.l.b16 %v51
  %v230 = vunpack.c.l.b16 %v52
  %v231 = vunpack.c.l.b16 %v53
  %v232 = vunpack.c.l.b16 %v54
  %v233 = vunpack.c.l.b16 %v55
  %v234 = vunpack.c.l.b16 %v56
  %v235 = vunpack.c.l.b16 %v57
  %v236 = vunpack.c.l.b16 %v58
  %v237 = vunpack.c.l.b16 %v59
  %v238 = vunpack.c.l.b16 %v60
  %v239 = vunpack.c.l.b16 %v61
  %v240 = vunpack.c.l.b16 %v62
  %v241 = vunpack.c.l.b16 %v63
  %v242 = vunpack.c.l.b16 %v64
  %v243 = vunpack.c.l.b16 %v65
  %v244 = vunpack.c.l.b16 %v66
  %v245 = vunpack.c.l.b16 %v67
  %v246 = vunpack.c.l.b16 %v68
  %v247 = vunpack.c.l.b16 %v69
  %v248 = vunpack.c.l.b16 %v70
  %v249 = vunpack.c.l.b16 %v71
  %v250 = vunpack.c.l.b16 %v72
  %v251 = vunpack.c.l.b16 %v73
  %v252 = vunpack.c.l.b16 %v74
  %v253 = vunpack.c.l.b16 %v75
  %v254 = vunpack.c.l.b16 %v76
  %v255 = vunpack.c.l.b16 %v77
  %v256 = vunpack.c.l.b16 %v78
  %v257 = vunpack.c.l.b16 %v79
  %v258 = vunpack.c.l.b16 %v80
  %v259 = vunpack.c.l.b16 %v81
  %v260 = vunpack.c.l.b16 %v82
  %v261 = vunpack.c.l.b16 %v83
  %v262 = vunpack.c.l.b16 %v84
  %v263 = vunpack.c.l.b16 %v85
  %v264 = vunpack.c.l.b16 %v86
  %v265 = vunpack.c.l.b16 %v87
  %v266 = vunpack.c.l.b16 %v88
  %v267 = vunpack.c.l.b16 %v89
  %v268 = vunpack.c.l.b16 %v90
  %v269 = vunpack.c.l.b16 %v91
  %v270 = vunpack.c.l.b16 %v92
  %v271 = vunpack.c.l.b16 %v93
  %v272 = vunpack.c.l.b16 %v94
  %v273 = vunpack.c.l.b16 %v95
  %v274 = vunpack.c.l.b16 %v96
  %v275 = vunpack.c.l.b16 %v97
  %v276 = vpack.c.b16 %v197, %v196
  %v277 = vpack.c.b16 %v199, %v198
  %v278 = vpack.c.b16 %v201, %v200
  %v279 = vpack.c.b16 %v203, %v202
  %v280 = vpack.c.b16 %v205, %v204
  %v281 = vpack.c.b16 %v207, %v206
  %v282 = vpack.c.b16 %v209, %v208
  %v283 = vpack.c.b16 %v211, %v210
  %v284 = vpack.c.b16 %v213, %v212
  %v285 = vpack.c.b16 %v215, %v214
  %v286 = vpack.c.b16 %v217, %v216
  %v287 = vpack.c.b16 %v219, %v218
  %v288 = vpack.c.b16 %v221, %v220
  %v289 = vpack.c.b16 %v223, %v222
  %v290 = vpack.c.b16 %v225, %v224
  %v291 = vpack.c.b16 %v227, %v226
  %v292 = vpack.c.b16 %v229, %v228
  %v293 = vpack.c.b16 %v231, %v230
  %v294 = vpack.c.b16 %v233, %v232
  %v295 = vpack.c.b16 %v235, %v234
  %v296 = vpack.c.b16 %v237, %v236
  %v297 = vpack.c.b16 %v239, %v238
  %v298 = vpack.c.b16 %v241, %v240
  %v299 = vpack.c.b16 %v243, %v242
  %v300 = vpack.c.b16 %v245, %v244
  %v301 = vpack.c.b16 %v247, %v246
  %v302 = vpack.c.b16 %v249, %v248
  %v303 = vpack.c.b16 %v251, %v250
  %v304 = vpack.c.b16 %v253, %v252
  %v305 = vpack.c.b16 %v255, %v254
  %v306 = vpack.c.b16 %v257, %v256
  %v307 = vpack.c.b16 %v259, %v258
  %v308 = vpack.c.b16 %v261, %v260
  %v309 = vpack.c.b16 %v263, %v262
  %v310 = vpack.c.b16 %v265, %v264
  %v311 = vpack.c.b16 %v267, %v266
  %v312 = vpack.c.b16 %v269, %v268
  %v313 = vpack.c.b16 %v271, %v270
  %v314 = vpack.c.b16 %v273, %v272
  %v315 = vpack.c.b16 %v275, %v274
  %356 = vmatprep.subr.bf16.mxu0 0
  %357 = vmatpush1.bf16.msra.mxu0 %v276
  %358 = vmatprep.subr.bf16.mxu0 0
  %359 = vmatpush1.bf16.msra.mxu0 %v277
  %360 = vmatprep.subr.bf16.mxu0 0
  %361 = vmatpush1.bf16.msra.mxu0 %v278
  %362 = vmatprep.subr.bf16.mxu0 0
  %363 = vmatpush1.bf16.msra.mxu0 %v279
  %364 = vmatprep.subr.bf16.mxu0 0
  %365 = vmatpush1.bf16.msra.mxu0 %v280
  %366 = vmatprep.subr.bf16.mxu0 0
  %367 = vmatpush1.bf16.msra.mxu0 %v281
  %368 = vmatprep.subr.bf16.mxu0 0
  %369 = vmatpush1.bf16.msra.mxu0 %v282
  %370 = vmatprep.subr.bf16.mxu0 0
  %371 = vmatpush1.bf16.msra.mxu0 %v283
  %372 = vmatprep.subr.bf16.mxu0 0
  %373 = vmatpush1.bf16.msra.mxu0 %v284
  %374 = vmatprep.subr.bf16.mxu0 0
  %375 = vmatpush1.bf16.msra.mxu0 %v285
  %376 = vmatprep.subr.bf16.mxu0 0
  %377 = vmatpush1.bf16.msra.mxu0 %v286
  %378 = vmatprep.subr.bf16.mxu0 0
  %379 = vmatpush1.bf16.msra.mxu0 %v287
  %380 = vmatprep.subr.bf16.mxu0 0
  %381 = vmatpush1.bf16.msra.mxu0 %v288
  %382 = vmatprep.subr.bf16.mxu0 0
  %383 = vmatpush1.bf16.msra.mxu0 %v289
  %384 = vmatprep.subr.bf16.mxu0 0
  %385 = vmatpush1.bf16.msra.mxu0 %v290
  %386 = vmatprep.subr.bf16.mxu0 0
  %387 = vmatpush1.bf16.msra.mxu0 %v291
  %388 = vmatprep.mubr.bf16.mxu0 %v107
  %389 = vmatmul.mubr.bf16.gmra.mrb[0].mxu0 %v106
  %v390 = vpop.f32.mrb[0].mxu0
  %v391 = vadd.f32 0.0, %v390
  %v392 = vpop.f32.mrb[0].mxu0
  %v393 = vpop.f32.mrb[0].mxu0
  %v394 = vpop.f32.mrb[0].mxu0
  %395 = vdwg.mxu0
  %396 = vmatprep.subr.bf16.mxu0 0
  %397 = vmatpush1.bf16.msra.mxu0 %v292
  %398 = vmatprep.subr.bf16.mxu0 0
  %399 = vmatpush1.bf16.msra.mxu0 %v293
  %400 = vmatprep.subr.bf16.mxu0 0
  %401 = vmatpush1.bf16.msra.mxu0 %v294
  %402 = vmatprep.subr.bf16.mxu0 0
  %403 = vmatpush1.bf16.msra.mxu0 %v295
  %404 = vmatprep.subr.bf16.mxu0 0
  %405 = vmatpush1.bf16.msra.mxu0 %v296
  %406 = vmatprep.subr.bf16.mxu0 0
  %407 = vmatpush1.bf16.msra.mxu0 %v297
  %408 = vmatprep.subr.bf16.mxu0 0
  %409 = vmatpush1.bf16.msra.mxu0 %v298
  %410 = vmatprep.subr.bf16.mxu0 0
  %411 = vmatpush1.bf16.msra.mxu0 %v299
  %412 = vmatprep.subr.bf16.mxu0 0
  %413 = vmatpush1.bf16.msra.mxu0 %v300
  %414 = vmatprep.subr.bf16.mxu0 0
  %415 = vmatpush1.bf16.msra.mxu0 %v301
  %416 = vmatprep.subr.bf16.mxu0 0
  %417 = vmatpush1.bf16.msra.mxu0 %v302
  %418 = vmatprep.subr.bf16.mxu0 0
  %419 = vmatpush1.bf16.msra.mxu0 %v303
  %420 = vmatprep.subr.bf16.mxu0 0
  %421 = vmatpush1.bf16.msra.mxu0 %v304
  %422 = vmatprep.subr.bf16.mxu0 0
  %423 = vmatpush1.bf16.msra.mxu0 %v305
  %424 = vmatprep.subr.bf16.mxu0 0
  %425 = vmatpush1.bf16.msra.mxu0 %v306
  %426 = vmatprep.subr.bf16.mxu0 0
  %427 = vmatpush1.bf16.msra.mxu0 %v307
  %428 = vmatprep.mubr.bf16.mxu0 %v109
  %429 = vmatmul.mubr.bf16.gmra.mrb[0].mxu0 %v108
  %v430 = vpop.f32.mrb[0].mxu0
  %v431 = vadd.f32 %v391, %v430
  %v432 = vpop.f32.mrb[0].mxu0
  %v433 = vpop.f32.mrb[0].mxu0
  %v434 = vpop.f32.mrb[0].mxu0
  %435 = vdwg.mxu0
  %436 = vmatprep.subr.bf16.mxu0 0
  %437 = vmatpush1.bf16.msra.mxu0 %v308
  %438 = vmatprep.subr.bf16.mxu0 0
  %439 = vmatpush1.bf16.msra.mxu0 %v309
  %440 = vmatprep.subr.bf16.mxu0 0
  %441 = vmatpush1.bf16.msra.mxu0 %v310
  %442 = vmatprep.subr.bf16.mxu0 0
  %443 = vmatpush1.bf16.msra.mxu0 %v311
  %444 = vmatprep.subr.bf16.mxu0 0
  %445 = vmatpush1.bf16.msra.mxu0 %v312
  %446 = vmatprep.subr.bf16.mxu0 0
  %447 = vmatpush1.bf16.msra.mxu0 %v313
  %448 = vmatprep.subr.bf16.mxu0 0
  %449 = vmatpush1.bf16.msra.mxu0 %v314
  %450 = vmatprep.subr.bf16.mxu0 0
  %451 = vmatpush1.bf16.msra.mxu0 %v315
  %452 = vmatprep.subr.bf16.mxu0 0
  %453 = vmatpush1.bf16.msra.mxu0 0
  %454 = vmatprep.subr.bf16.mxu0 0
  %455 = vmatpush1.bf16.msra.mxu0 0
  %456 = vmatprep.subr.bf16.mxu0 0
  %457 = vmatpush1.bf16.msra.mxu0 0
  %458 = vmatprep.subr.bf16.mxu0 0
  %459 = vmatpush1.bf16.msra.mxu0 0
  %460 = vmatprep.subr.bf16.mxu0 0
  %461 = vmatpush1.bf16.msra.mxu0 0
  %462 = vmatprep.subr.bf16.mxu0 0
  %463 = vmatpush1.bf16.msra.mxu0 0
  %464 = vmatprep.subr.bf16.mxu0 0
  %465 = vmatpush1.bf16.msra.mxu0 0
  %466 = vmatprep.subr.bf16.mxu0 0
  %467 = vmatpush1.bf16.msra.mxu0 0
  %468 = vmatprep.mubr.bf16.mxu0 0
  %469 = vmatmul.mubr.bf16.gmra.mrb[0].mxu0 %v110
  %v470 = vpop.f32.mrb[0].mxu0
  %v471 = vadd.f32 %v431, %v470
  %v472 = vpop.f32.mrb[0].mxu0
  %v473 = vpop.f32.mrb[0].mxu0
  %v474 = vpop.f32.mrb[0].mxu0
  %475 = vdwg.mxu0
  %v476 = vmax.f32 %v471, 0.0
  %v477 = vpack.c.bf16 %v476, %v476
  %v478 = vsub.f32 0.0, %v471
  %v479 = vmax.f32 %v478, 0.0
  %v480 = vpack.c.bf16 %v479, %v479
  %v481 = vld [vmem:[%s2] sm:$0xf]
  %v482 = vld [vmem:[%s2 + $0x4] sm:$0xf]
  %v483 = vld [vmem:[%s2 + $0x8] sm:$0xf]
  %v484 = vld [vmem:[%s2 + $0xc] sm:$0xf]
  %v485 = vld [vmem:[%s2 + $0x10] sm:$0xf]
  %v486 = vld [vmem:[%s2 + $0x14] sm:$0xf]
  %v487 = vld [vmem:[%s2 + $0x18] sm:$0xf]
  %v488 = vld [vmem:[%s2 + $0x1c] sm:$0xf]
  %v489 = vld [vmem:[%s2 + $0x20] sm:$0xf]
  %v490 = vld [vmem:[%s2 + $0x24] sm:$0xf]
  %v491 = vld [vmem:[%s2 + $0x28] sm:$0xf]
  %v492 = vld [vmem:[%s2 + $0x2c] sm:$0xf]
  %v493 = vld [vmem:[%s2 + $0x30] sm:$0xf]
  %v494 = vld [vmem:[%s2 + $0x34] sm:$0xf]
  %v495 = vld [vmem:[%s2 + $0x38] sm:$0xf]
  %v496 = vld [vmem:[%s2 + $0x3c] sm:$0xf]
  %v497 = vld [vmem:[%s2 + $0x40] sm:$0xf]
  %v498 = vld [vmem:[%s2 + $0x44] sm:$0xf]
  %v499 = vld [vmem:[%s2 + $0x48] sm:$0xf]
  %v500 = vld [vmem:[%s2 + $0x4c] sm:$0xf]
  %v501 = vld [vmem:[%s2 + $0x50] sm:$0xf]
  %v502 = vld [vmem:[%s2 + $0x54] sm:$0xf]
  %v503 = vld [vmem:[%s2 + $0x58] sm:$0xf]
  %v504 = vld [vmem:[%s2 + $0x5c] sm:$0xf]
  %v505 = vld [vmem:[%s2 + $0x60] sm:$0xf]
  %v506 = vld [vmem:[%s2 + $0x64] sm:$0xf]
  %v507 = vld [vmem:[%s2 + $0x68] sm:$0xf]
  %v508 = vld [vmem:[%s2 + $0x6c] sm:$0xf]
  %v509 = vld [vmem:[%s2 + $0x70] sm:$0xf]
  %v510 = vld [vmem:[%s2 + $0x74] sm:$0xf]
  %v511 = vld [vmem:[%s2 + $0x78] sm:$0xf]
  %v512 = vld [vmem:[%s2 + $0x7c] sm:$0xf]
  %v545 = vunpack.c.l.b16 %v481
  %v546 = vunpack.c.l.b16 %v482
  %v547 = vunpack.c.l.b16 %v483
  %v548 = vunpack.c.l.b16 %v484
  %v549 = vunpack.c.l.b16 %v485
  %v550 = vunpack.c.l.b16 %v486
  %v551 = vunpack.c.l.b16 %v487
  %v552 = vunpack.c.l.b16 %v488
  %v553 = vunpack.c.l.b16 %v489
  %v554 = vunpack.c.l.b16 %v490
  %v555 = vunpack.c.l.b16 %v491
  %v556 = vunpack.c.l.b16 %v492
  %v557 = vunpack.c.l.b16 %v493
  %v558 = vunpack.c.l.b16 %v494
  %v559 = vunpack.c.l.b16 %v495
  %v560 = vunpack.c.l.b16 %v496
  %v561 = vunpack.c.l.b16 %v497
  %v562 = vunpack.c.l.b16 %v498
  %v563 = vunpack.c.l.b16 %v499
  %v564 = vunpack.c.l.b16 %v500
  %v565 = vunpack.c.l.b16 %v501
  %v566 = vunpack.c.l.b16 %v502
  %v567 = vunpack.c.l.b16 %v503
  %v568 = vunpack.c.l.b16 %v504
  %v569 = vunpack.c.l.b16 %v505
  %v570 = vunpack.c.l.b16 %v506
  %v571 = vunpack.c.l.b16 %v507
  %v572 = vunpack.c.l.b16 %v508
  %v573 = vunpack.c.l.b16 %v509
  %v574 = vunpack.c.l.b16 %v510
  %v575 = vunpack.c.l.b16 %v511
  %v576 = vunpack.c.l.b16 %v512
  %v577 = vpack.c.b16 %v546, %v545
  %v578 = vpack.c.b16 %v548, %v547
  %v579 = vpack.c.b16 %v550, %v549
  %v580 = vpack.c.b16 %v552, %v551
  %v581 = vpack.c.b16 %v554, %v553
  %v582 = vpack.c.b16 %v556, %v555
  %v583 = vpack.c.b16 %v558, %v557
  %v584 = vpack.c.b16 %v560, %v559
  %v585 = vpack.c.b16 %v562, %v561
  %v586 = vpack.c.b16 %v564, %v563
  %v587 = vpack.c.b16 %v566, %v565
  %v588 = vpack.c.b16 %v568, %v567
  %v589 = vpack.c.b16 %v570, %v569
  %v590 = vpack.c.b16 %v572, %v571
  %v591 = vpack.c.b16 %v574, %v573
  %v592 = vpack.c.b16 %v576, %v575
  %609 = vmatprep.subr.bf16.mxu0 0
  %610 = vmatpush1.bf16.msra.mxu0 %v577
  %611 = vmatprep.subr.bf16.mxu0 0
  %612 = vmatpush1.bf16.msra.mxu0 %v578
  %613 = vmatprep.subr.bf16.mxu0 0
  %614 = vmatpush1.bf16.msra.mxu0 %v579
  %615 = vmatprep.subr.bf16.mxu0 0
  %616 = vmatpush1.bf16.msra.mxu0 %v580
  %617 = vmatprep.subr.bf16.mxu0 0
  %618 = vmatpush1.bf16.msra.mxu0 %v581
  %619 = vmatprep.subr.bf16.mxu0 0
  %620 = vmatpush1.bf16.msra.mxu0 %v582
  %621 = vmatprep.subr.bf16.mxu0 0
  %622 = vmatpush1.bf16.msra.mxu0 %v583
  %623 = vmatprep.subr.bf16.mxu0 0
  %624 = vmatpush1.bf16.msra.mxu0 %v584
  %625 = vmatprep.subr.bf16.mxu0 0
  %626 = vmatpush1.bf16.msra.mxu0 %v585
  %627 = vmatprep.subr.bf16.mxu0 0
  %628 = vmatpush1.bf16.msra.mxu0 %v586
  %629 = vmatprep.subr.bf16.mxu0 0
  %630 = vmatpush1.bf16.msra.mxu0 %v587
  %631 = vmatprep.subr.bf16.mxu0 0
  %632 = vmatpush1.bf16.msra.mxu0 %v588
  %633 = vmatprep.subr.bf16.mxu0 0
  %634 = vmatpush1.bf16.msra.mxu0 %v589
  %635 = vmatprep.subr.bf16.mxu0 0
  %636 = vmatpush1.bf16.msra.mxu0 %v590
  %637 = vmatprep.subr.bf16.mxu0 0
  %638 = vmatpush1.bf16.msra.mxu0 %v591
  %639 = vmatprep.subr.bf16.mxu0 0
  %640 = vmatpush1.bf16.msra.mxu0 %v592
  %641 = vmatprep.mubr.bf16.mxu0 %v480
  %642 = vmatmul.mubr.bf16.gmra.mrb[0].mxu0 %v477
  %v643 = vpop.f32.mrb[0].mxu0
  %v644 = vadd.f32 0.0, %v643
  %v645 = vpop.f32.mrb[0].mxu0
  %v646 = vpop.f32.mrb[0].mxu0
  %v647 = vpop.f32.mrb[0].mxu0
  %648 = vdwg.mxu0
  %v649 = vmax.f32 %v644, 0.0
  %650 = vst [vmem:[%s3] sm:$0xff] %v649
  // Predicated region
  $region14: #{conv2d_subsampling_forward.1} parent=0 // pred_check
    _
  $region15: #{conv2d_subsampling_forward.1} parent=0 // pred_check_branch
    %652 = sbr.rel (0) target = $region17
  $region16: #{conv2d_subsampling_forward.1} parent=0 // pred_region
    _
  $region17: #{conv2d_subsampling_forward.1} parent=0 // pred_fallthru
    _
  // Predicated region
  $region18: #{conv2d_subsampling_forward.1} parent=0 // pred_check
    _
  $region19: #{conv2d_subsampling_forward.1} parent=0 // pred_check_branch
    %654 = sbr.rel (0) target = $region21
  $region20: #{conv2d_subsampling_forward.1} parent=0 // pred_region
    _
  $region21: #{conv2d_subsampling_forward.1} parent=0 // pred_fallthru
    _

</llo_original>
